<compile_context>
chip_gen: v6e
topology: v6e:2x2x1
jax: 0.10.0
libtpu: 0.0.40
codegen_flags: <defaults>
</compile_context>

<pallas_src>
import functools

import jax
import jax.numpy as jnp
from jax import lax
from jax.experimental import pallas as pl
from jax.experimental.pallas import tpu as pltpu


_LEAKY_SLOPE = 0.01  # F.leaky_relu default negative_slope


def _round_up(x: int, m: int) -> int:
    return (x + m - 1) // m * m


def _lowbias32(x):
    """Cheap integer avalanche hash, uint32 -> uint32 (pure VPU ops)."""
    x = x ^ (x >> jnp.uint32(16))
    x = x * jnp.uint32(0x7FEB352D)
    x = x ^ (x >> jnp.uint32(15))
    x = x * jnp.uint32(0x846CA68B)
    x = x ^ (x >> jnp.uint32(16))
    return x


def _make_mlp_kernel(num_layers: int, drop_p: float, seed: int,
                     batch_tile: int, total_cols: int):
    """Fused MLP kernel operating on [features, batch_tile] tiles."""
    # Drop an element iff its 24-bit uniform sample is < drop_thresh.
    drop_thresh = int(round(drop_p * float(1 << 24)))
    keep_scale = 1.0 / (1.0 - drop_p) if drop_p > 0.0 else 1.0
    # Static per-layer salts folding in the user seed.
    salts = [((seed & 0xFFFFFFFF) * 0x9E3779B1 + (l + 1) * 0x85EBCA77) & 0xFFFFFFFF
             for l in range(num_layers)]

    def kernel(x_ref, *refs):
        # refs = (w0, b0, w1, b1, ..., w_{L-1}, b_{L-1}, out_ref)
        out_ref = refs[-1]
        wb = refs[:-1]

        # Global sample index of the first lane of this batch tile.
        col0 = (pl.program_id(0) * batch_tile).astype(jnp.uint32)

        h = x_ref[...].astype(jnp.float32)               # [d_in, batch_tile]
        for l in range(num_layers):
            w = wb[2 * l][...]                            # [d_out, d_in] (torch layout)
            b = wb[2 * l + 1][...]                        # [d_out, 1]
            # (x @ W.T + b).T  ==  W @ x.T + b
            h = jnp.dot(w, h, preferred_element_type=jnp.float32) + b

            # F.dropout(training=True): zero w.p. p, scale survivors by 1/(1-p).
            if drop_p > 0.0:
                d_out = h.shape[0]
                rows = lax.broadcasted_iota(jnp.int32, (d_out, batch_tile), 0)
                cols = lax.broadcasted_iota(jnp.int32, (d_out, batch_tile), 1)
                ctr = (rows.astype(jnp.uint32) * jnp.uint32(total_cols)
                       + cols.astype(jnp.uint32) + col0)
                bits = _lowbias32(ctr ^ jnp.uint32(salts[l]))
                r24 = (bits >> jnp.uint32(8)).astype(jnp.int32)  # uniform [0, 2^24)
                h = jnp.where(r24 >= jnp.int32(drop_thresh),
                              h * jnp.float32(keep_scale),
                              jnp.float32(0.0))

            # F.leaky_relu (negative_slope = 0.01).
            h = jnp.where(h > 0, h, jnp.float32(_LEAKY_SLOPE) * h)

        out_ref[...] = h.astype(out_ref.dtype)

    return kernel


def init_mlp_params(key, insize: int, outsize: int, morelayers: int = 0):
    """Parameters with the same layer shapes as the module.

    Returns a list of (W, b) in native PyTorch layout: W is [out, in], b is [out].
    """
    dims = [insize, insize // 2, insize // 4] + [insize // 4] * morelayers + [outsize]
    params = []
    for i in range(len(dims) - 1):
        d_in, d_out = dims[i], dims[i + 1]
        key, kw, kb = jax.random.split(key, 3)
        bound = 1.0 / float(d_in) ** 0.5
        w = jax.random.uniform(kw, (d_out, d_in), jnp.float32, -bound, bound)
        b = jax.random.uniform(kb, (d_out,), jnp.float32, -bound, bound)
        params.append((w, b))
    return params


def mlp_reference(x, params):
    """Pure-JAX reference (dropout disabled)."""
    h = x.astype(jnp.float32)
    for (w, b) in params:
        h = h @ w.T + b.reshape(1, -1)
        h = jnp.where(h > 0, h, _LEAKY_SLOPE * h)
    return h


@functools.partial(jax.jit, static_argnames=("drop_p", "seed", "batch_tile"))
def mlp_forward(x, params, *, drop_p: float = 0.0, seed: int = 0,
                batch_tile: int = 1024):
    """Fused Pallas MLP forward.  x: [B, insize] float32 -> [B, outsize]."""
    B, insize = x.shape
    num_layers = len(params)
    outsize = params[-1][0].shape[0]

    # Lane-dense batch tiling: tile is a multiple of 128, batch padded to it.
    bt = min(batch_tile, _round_up(B, 128))
    bt = _round_up(bt, 128)
    b_pad = _round_up(B, bt)

    # [B, insize] -> [insize, B_pad]  (batch on the lane axis).
    xt = x.T.astype(jnp.float32)
    if b_pad != B:
        xt = jnp.pad(xt, ((0, 0), (0, b_pad - B)))

    in_specs = [pl.BlockSpec((insize, bt), lambda i: (0, i))]
    flat_inputs = [xt]
    for (w, b) in params:
        w = w.astype(jnp.float32)
        b = b.reshape(-1, 1).astype(jnp.float32)          # [out, 1] column bias
        in_specs.append(pl.BlockSpec(w.shape, lambda i: (0, 0)))
        in_specs.append(pl.BlockSpec(b.shape, lambda i: (0, 0)))
        flat_inputs.append(w)
        flat_inputs.append(b)

    kernel = _make_mlp_kernel(num_layers, float(drop_p), int(seed), bt, b_pad)

    flops = 2 * b_pad * sum(w.shape[0] * w.shape[1] for (w, _) in params)
    bytes_accessed = 4 * (insize * b_pad + outsize * b_pad
                          + sum(w.size + w.shape[0] for (w, _) in params))

    out_t = pl.pallas_call(
        kernel,
        out_shape=jax.ShapeDtypeStruct((outsize, b_pad), jnp.float32),
        grid=(b_pad // bt,),
        in_specs=in_specs,
        out_specs=pl.BlockSpec((outsize, bt), lambda i: (0, i)),
        compiler_params=pltpu.CompilerParams(
            dimension_semantics=("parallel",),   # batch tiles are independent
        ),
        cost_estimate=pl.CostEstimate(
            flops=flops, transcendentals=0, bytes_accessed=bytes_accessed),
    )(*flat_inputs)

    # [outsize, B_pad] -> [B, outsize]
    return out_t[:, :B].T.astype(x.dtype)


if __name__ == "__main__":
    # Small shapes consistent with the module: insize=32, outsize=8,
    # morelayers=1 -> Linear chain 32 -> 16 -> 8 -> 8 -> 8.
    batch = 200            # deliberately not a multiple of 128 (exercises padding)
    insize = 32
    outsize = 8
    morelayers = 1
    cls_do_p = 0.1         # expconf.cls_do_p

    key = jax.random.PRNGKey(0)
    key, kx = jax.random.split(key)
    x = jax.random.normal(kx, (batch, insize), jnp.float32)
    params = init_mlp_params(key, insize, outsize, morelayers=morelayers)

    # Correctness check against a pure-JAX reference with dropout disabled.
    out_ref = mlp_reference(x, params)
    out_nodrop = jax.block_until_ready(
        mlp_forward(x, params, drop_p=0.0, seed=1234))
    assert out_nodrop.shape == (batch, outsize)
    assert jnp.allclose(out_nodrop, out_ref, atol=2e-2, rtol=2e-2)

    # Training-mode forward (F.dropout training=True semantics), as in the module.
    out = jax.block_until_ready(
        mlp_forward(x, params, drop_p=cls_do_p, seed=1234))
    assert out.shape == (batch, outsize)
    assert out.dtype == jnp.float32
    assert bool(jnp.all(jnp.isfinite(out)))
    print("KERNEL_OK")
</pallas_src>

<mosaic_0001>
module attributes {stable_mosaic.version = 11 : i64} {
  func.func @kernel(%arg0: i32, %arg1: memref<32x256xf32, #tpu.memory_space<vmem>>, %arg2: memref<16x32xf32, #tpu.memory_space<vmem>>, %arg3: memref<16x1xf32, #tpu.memory_space<vmem>>, %arg4: memref<8x16xf32, #tpu.memory_space<vmem>>, %arg5: memref<8x1xf32, #tpu.memory_space<vmem>>, %arg6: memref<8x8xf32, #tpu.memory_space<vmem>>, %arg7: memref<8x1xf32, #tpu.memory_space<vmem>>, %arg8: memref<8x8xf32, #tpu.memory_space<vmem>>, %arg9: memref<8x1xf32, #tpu.memory_space<vmem>>, %arg10: memref<8x256xf32, #tpu.memory_space<vmem>>) attributes {dimension_semantics = [#tpu.dimension_semantics<parallel>], iteration_bounds = array<i64: 1>, scalar_prefetch = 0 : i64, scratch_operands = 0 : i64, tpu.core_type = #tpu.core_type<tc>, window_params = [{transform_indices = @transform_0, window_bounds = array<i64: 32, 256>}, {pipeline_mode = #tpu.pipeline_mode<synchronous>, transform_indices = @transform_1, window_bounds = array<i64: 16, 32>}, {pipeline_mode = #tpu.pipeline_mode<synchronous>, transform_indices = @transform_2, window_bounds = array<i64: 16, 1>}, {pipeline_mode = #tpu.pipeline_mode<synchronous>, transform_indices = @transform_3, window_bounds = array<i64: 8, 16>}, {pipeline_mode = #tpu.pipeline_mode<synchronous>, transform_indices = @transform_4, window_bounds = array<i64: 8, 1>}, {pipeline_mode = #tpu.pipeline_mode<synchronous>, transform_indices = @transform_5, window_bounds = array<i64: 8, 8>}, {pipeline_mode = #tpu.pipeline_mode<synchronous>, transform_indices = @transform_6, window_bounds = array<i64: 8, 1>}, {pipeline_mode = #tpu.pipeline_mode<synchronous>, transform_indices = @transform_7, window_bounds = array<i64: 8, 8>}, {pipeline_mode = #tpu.pipeline_mode<synchronous>, transform_indices = @transform_8, window_bounds = array<i64: 8, 1>}, {transform_indices = @transform_9, window_bounds = array<i64: 8, 256>}]} {
    %c0 = arith.constant 0 : index
    %c0_0 = arith.constant 0 : index
    %0 = vector.load %arg1[%c0, %c0_0] : memref<32x256xf32, #tpu.memory_space<vmem>>, vector<32x256xf32>
    %c0_1 = arith.constant 0 : index
    %c0_2 = arith.constant 0 : index
    %1 = vector.load %arg2[%c0_1, %c0_2] : memref<16x32xf32, #tpu.memory_space<vmem>>, vector<16x32xf32>
    %c0_3 = arith.constant 0 : index
    %c0_4 = arith.constant 0 : index
    %2 = vector.load %arg3[%c0_3, %c0_4] : memref<16x1xf32, #tpu.memory_space<vmem>>, vector<16x1xf32>
    %cst = arith.constant dense<0.000000e+00> : vector<16x256xf32>
    %3 = tpu.matmul %1, %0, %cst {dimension_numbers = #tpu.dot_dimension_numbers<[1], [0], [0], [1], [0, 0, 1, 1], [], []>} : vector<16x32xf32>, vector<32x256xf32>, vector<16x256xf32> -> vector<16x256xf32>
    %4 = vector.broadcast %2 : vector<16x1xf32> to vector<16x256xf32>
    %5 = arith.addf %3, %4 : vector<16x256xf32>
    %cst_5 = arith.constant 0.000000e+00 : f32
    %6 = vector.broadcast %cst_5 : f32 to vector<16x256xf32>
    %7 = arith.cmpf ogt, %5, %6 : vector<16x256xf32>
    %cst_6 = arith.constant 0.00999999977 : f32
    %8 = vector.broadcast %cst_6 : f32 to vector<16x256xf32>
    %9 = arith.mulf %8, %5 : vector<16x256xf32>
    %10 = arith.select %7, %5, %9 : vector<16x256xi1>, vector<16x256xf32>
    %c0_7 = arith.constant 0 : index
    %c0_8 = arith.constant 0 : index
    %11 = vector.load %arg4[%c0_7, %c0_8] : memref<8x16xf32, #tpu.memory_space<vmem>>, vector<8x16xf32>
    %c0_9 = arith.constant 0 : index
    %c0_10 = arith.constant 0 : index
    %12 = vector.load %arg5[%c0_9, %c0_10] : memref<8x1xf32, #tpu.memory_space<vmem>>, vector<8x1xf32>
    %cst_11 = arith.constant dense<0.000000e+00> : vector<8x256xf32>
    %13 = tpu.matmul %11, %10, %cst_11 {dimension_numbers = #tpu.dot_dimension_numbers<[1], [0], [0], [1], [0, 0, 1, 1], [], []>} : vector<8x16xf32>, vector<16x256xf32>, vector<8x256xf32> -> vector<8x256xf32>
    %14 = vector.broadcast %12 : vector<8x1xf32> to vector<8x256xf32>
    %15 = arith.addf %13, %14 : vector<8x256xf32>
    %cst_12 = arith.constant 0.000000e+00 : f32
    %16 = vector.broadcast %cst_12 : f32 to vector<8x256xf32>
    %17 = arith.cmpf ogt, %15, %16 : vector<8x256xf32>
    %cst_13 = arith.constant 0.00999999977 : f32
    %18 = vector.broadcast %cst_13 : f32 to vector<8x256xf32>
    %19 = arith.mulf %18, %15 : vector<8x256xf32>
    %20 = arith.select %17, %15, %19 : vector<8x256xi1>, vector<8x256xf32>
    %c0_14 = arith.constant 0 : index
    %c0_15 = arith.constant 0 : index
    %21 = vector.load %arg6[%c0_14, %c0_15] : memref<8x8xf32, #tpu.memory_space<vmem>>, vector<8x8xf32>
    %c0_16 = arith.constant 0 : index
    %c0_17 = arith.constant 0 : index
    %22 = vector.load %arg7[%c0_16, %c0_17] : memref<8x1xf32, #tpu.memory_space<vmem>>, vector<8x1xf32>
    %cst_18 = arith.constant dense<0.000000e+00> : vector<8x256xf32>
    %23 = tpu.matmul %21, %20, %cst_18 {dimension_numbers = #tpu.dot_dimension_numbers<[1], [0], [0], [1], [0, 0, 1, 1], [], []>} : vector<8x8xf32>, vector<8x256xf32>, vector<8x256xf32> -> vector<8x256xf32>
    %24 = vector.broadcast %22 : vector<8x1xf32> to vector<8x256xf32>
    %25 = arith.addf %23, %24 : vector<8x256xf32>
    %cst_19 = arith.constant 0.000000e+00 : f32
    %26 = vector.broadcast %cst_19 : f32 to vector<8x256xf32>
    %27 = arith.cmpf ogt, %25, %26 : vector<8x256xf32>
    %cst_20 = arith.constant 0.00999999977 : f32
    %28 = vector.broadcast %cst_20 : f32 to vector<8x256xf32>
    %29 = arith.mulf %28, %25 : vector<8x256xf32>
    %30 = arith.select %27, %25, %29 : vector<8x256xi1>, vector<8x256xf32>
    %c0_21 = arith.constant 0 : index
    %c0_22 = arith.constant 0 : index
    %31 = vector.load %arg8[%c0_21, %c0_22] : memref<8x8xf32, #tpu.memory_space<vmem>>, vector<8x8xf32>
    %c0_23 = arith.constant 0 : index
    %c0_24 = arith.constant 0 : index
    %32 = vector.load %arg9[%c0_23, %c0_24] : memref<8x1xf32, #tpu.memory_space<vmem>>, vector<8x1xf32>
    %cst_25 = arith.constant dense<0.000000e+00> : vector<8x256xf32>
    %33 = tpu.matmul %31, %30, %cst_25 {dimension_numbers = #tpu.dot_dimension_numbers<[1], [0], [0], [1], [0, 0, 1, 1], [], []>} : vector<8x8xf32>, vector<8x256xf32>, vector<8x256xf32> -> vector<8x256xf32>
    %34 = vector.broadcast %32 : vector<8x1xf32> to vector<8x256xf32>
    %35 = arith.addf %33, %34 : vector<8x256xf32>
    %cst_26 = arith.constant 0.000000e+00 : f32
    %36 = vector.broadcast %cst_26 : f32 to vector<8x256xf32>
    %37 = arith.cmpf ogt, %35, %36 : vector<8x256xf32>
    %cst_27 = arith.constant 0.00999999977 : f32
    %38 = vector.broadcast %cst_27 : f32 to vector<8x256xf32>
    %39 = arith.mulf %38, %35 : vector<8x256xf32>
    %40 = arith.select %37, %35, %39 : vector<8x256xi1>, vector<8x256xf32>
    %c0_28 = arith.constant 0 : index
    %c0_29 = arith.constant 0 : index
    %41 = vector.load %arg10[%c0_28, %c0_29] : memref<8x256xf32, #tpu.memory_space<vmem>>, vector<8x256xf32>
    tpu.vector_store %arg10[%c0_28, %c0_29], %40 {strides = array<i32>} : memref<8x256xf32, #tpu.memory_space<vmem>>, vector<8x256xf32>,
    return
  }
  func.func @transform_0(%arg0: i32) -> (i32, i32) {
    %c0_i32 = arith.constant 0 : i32
    %c0_i32_0 = arith.constant 0 : i32
    return %c0_i32, %arg0 : i32, i32
  }
  func.func @transform_1(%arg0: i32) -> (i32, i32) {
    %c0_i32 = arith.constant 0 : i32
    %c0_i32_0 = arith.constant 0 : i32
    %c0_i32_1 = arith.constant 0 : i32
    return %c0_i32, %c0_i32_0 : i32, i32
  }
  func.func @transform_2(%arg0: i32) -> (i32, i32) {
    %c0_i32 = arith.constant 0 : i32
    %c0_i32_0 = arith.constant 0 : i32
    %c0_i32_1 = arith.constant 0 : i32
    return %c0_i32, %c0_i32_0 : i32, i32
  }
  func.func @transform_3(%arg0: i32) -> (i32, i32) {
    %c0_i32 = arith.constant 0 : i32
    %c0_i32_0 = arith.constant 0 : i32
    %c0_i32_1 = arith.constant 0 : i32
    return %c0_i32, %c0_i32_0 : i32, i32
  }
  func.func @transform_4(%arg0: i32) -> (i32, i32) {
    %c0_i32 = arith.constant 0 : i32
    %c0_i32_0 = arith.constant 0 : i32
    %c0_i32_1 = arith.constant 0 : i32
    return %c0_i32, %c0_i32_0 : i32, i32
  }
  func.func @transform_5(%arg0: i32) -> (i32, i32) {
    %c0_i32 = arith.constant 0 : i32
    %c0_i32_0 = arith.constant 0 : i32
    %c0_i32_1 = arith.constant 0 : i32
    return %c0_i32, %c0_i32_0 : i32, i32
  }
  func.func @transform_6(%arg0: i32) -> (i32, i32) {
    %c0_i32 = arith.constant 0 : i32
    %c0_i32_0 = arith.constant 0 : i32
    %c0_i32_1 = arith.constant 0 : i32
    return %c0_i32, %c0_i32_0 : i32, i32
  }
  func.func @transform_7(%arg0: i32) -> (i32, i32) {
    %c0_i32 = arith.constant 0 : i32
    %c0_i32_0 = arith.constant 0 : i32
    %c0_i32_1 = arith.constant 0 : i32
    return %c0_i32, %c0_i32_0 : i32, i32
  }
  func.func @transform_8(%arg0: i32) -> (i32, i32) {
    %c0_i32 = arith.constant 0 : i32
    %c0_i32_0 = arith.constant 0 : i32
    %c0_i32_1 = arith.constant 0 : i32
    return %c0_i32, %c0_i32_0 : i32, i32
  }
  func.func @transform_9(%arg0: i32) -> (i32, i32) {
    %c0_i32 = arith.constant 0 : i32
    %c0_i32_0 = arith.constant 0 : i32
    return %c0_i32, %arg0 : i32, i32
  }
}

</mosaic_0001>

<llo_original>
// kernel: mlp_forward.1
$region0: #{mlp_forward.1}
  #allocation0 [shape = 'u32[]', space=smem, size = 0x4, offset = 0x4, fixed_abs, tag = 'smem constant byte address 0x4 - core index']
  #allocation1 [shape = 'u32[144,128]{1,0:T(1,128)}', space=vmem, size = 0x12000, scoped, tag = 'internal scratch']
  %s0 = inlined_call_operand.vmem [shape: f32[32,256], index: 0, kind: input, shape index: {}]
  %s1 = inlined_call_operand.vmem [shape: f32[16,32], index: 1, kind: input, shape index: {}]
  %s2 = inlined_call_operand.vmem [shape: f32[16,1], index: 2, kind: input, shape index: {}]
  %s3 = inlined_call_operand.vmem [shape: f32[8,16], index: 3, kind: input, shape index: {}]
  %s4 = inlined_call_operand.vmem [shape: f32[8,1], index: 4, kind: input, shape index: {}]
  %s5 = inlined_call_operand.vmem [shape: f32[8,8], index: 5, kind: input, shape index: {}]
  %s6 = inlined_call_operand.vmem [shape: f32[8,1], index: 6, kind: input, shape index: {}]
  %s7 = inlined_call_operand.vmem [shape: f32[8,8], index: 7, kind: input, shape index: {}]
  %s8 = inlined_call_operand.vmem [shape: f32[8,1], index: 8, kind: input, shape index: {}]
  %s9 = inlined_call_operand.vmem [shape: f32[8,256], index: 9, kind: output, shape index: {}]
  %s10 = sld [smem:[#allocation0]]
  $region46: #{mlp_forward.1} parent=0
    _
  %s12 = ssub.s32 1, %s10
  %s13 = scalar_select 0, %s12, %s10
  // Predicated region
  $region2: #{mlp_forward.1} parent=0 // pred_check
    _
  $region3: #{mlp_forward.1} parent=0 // pred_check_branch
    %15 = sbr.rel (0) target = $region5
  $region4: #{mlp_forward.1} parent=0 // pred_region
    _
  $region5: #{mlp_forward.1} parent=0 // pred_fallthru
    _
  // Predicated region
  $region6: #{mlp_forward.1} parent=0 // pred_check
    _
  $region7: #{mlp_forward.1} parent=0 // pred_check_branch
    %17 = sbr.rel (0) target = $region9
  $region8: #{mlp_forward.1} parent=0 // pred_region
    _
  $region9: #{mlp_forward.1} parent=0 // pred_fallthru
    _
  // Predicated region
  $region10: #{mlp_forward.1} parent=0 // pred_check
    _
  $region11: #{mlp_forward.1} parent=0 // pred_check_branch
    %19 = sbr.rel (0) target = $region13
  $region12: #{mlp_forward.1} parent=0 // pred_region
    _
  $region13: #{mlp_forward.1} parent=0 // pred_fallthru
    _
  // Predicated region
  $region14: #{mlp_forward.1} parent=0 // pred_check
    _
  $region15: #{mlp_forward.1} parent=0 // pred_check_branch
    %21 = sbr.rel (0) target = $region17
  $region16: #{mlp_forward.1} parent=0 // pred_region
    _
  $region17: #{mlp_forward.1} parent=0 // pred_fallthru
    _
  // Predicated region
  $region18: #{mlp_forward.1} parent=0 // pred_check
    _
  $region19: #{mlp_forward.1} parent=0 // pred_check_branch
    %23 = sbr.rel (0) target = $region21
  $region20: #{mlp_forward.1} parent=0 // pred_region
    _
  $region21: #{mlp_forward.1} parent=0 // pred_fallthru
    _
  // Predicated region
  $region22: #{mlp_forward.1} parent=0 // pred_check
    _
  $region23: #{mlp_forward.1} parent=0 // pred_check_branch
    %25 = sbr.rel (0) target = $region25
  $region24: #{mlp_forward.1} parent=0 // pred_region
    _
  $region25: #{mlp_forward.1} parent=0 // pred_fallthru
    _
  // Predicated region
  $region26: #{mlp_forward.1} parent=0 // pred_check
    _
  $region27: #{mlp_forward.1} parent=0 // pred_check_branch
    %27 = sbr.rel (0) target = $region29
  $region28: #{mlp_forward.1} parent=0 // pred_region
    _
  $region29: #{mlp_forward.1} parent=0 // pred_fallthru
    _
  // Predicated region
  $region30: #{mlp_forward.1} parent=0 // pred_check
    _
  $region31: #{mlp_forward.1} parent=0 // pred_check_branch
    %29 = sbr.rel (0) target = $region33
  $region32: #{mlp_forward.1} parent=0 // pred_region
    _
  $region33: #{mlp_forward.1} parent=0 // pred_fallthru
    _
  // Predicated region
  $region34: #{mlp_forward.1} parent=0 // pred_check
    _
  $region35: #{mlp_forward.1} parent=0 // pred_check_branch
    %31 = sbr.rel (0) target = $region37
  $region36: #{mlp_forward.1} parent=0 // pred_region
    _
  $region37: #{mlp_forward.1} parent=0 // pred_fallthru
    _
  %v32 = vld [vmem:[%s0] sm:$0xff]
  %v33 = vld [vmem:[%s0 + $0x8] sm:$0xff]
  %v34 = vld [vmem:[%s0 + $0x10] sm:$0xff]
  %v35 = vld [vmem:[%s0 + $0x18] sm:$0xff]
  %v36 = vld [vmem:[%s0 + $0x20] sm:$0xff]
  %v37 = vld [vmem:[%s0 + $0x28] sm:$0xff]
  %v38 = vld [vmem:[%s0 + $0x30] sm:$0xff]
  %v39 = vld [vmem:[%s0 + $0x38] sm:$0xff]
  %v40 = vld [vmem:[%s1] sm:$0xff]
  %v41 = vld [vmem:[%s1 + $0x8] sm:$0xff]
  %v42 = vld [vmem:[%s2] sm:$0xff]
  %v43 = vld [vmem:[%s2 + $0x8] sm:$0xff]
  %45 = vset.pattern.permute.xlu0 0
  %46 = vperm.xlu0 %45, %v42
  %v47 = vpop.permute.xlu0 %46
  %50 = vset.pattern.permute.xlu0 0
  %51 = vperm.xlu0 %50, %v43
  %v52 = vpop.permute.xlu0 %51
  %vm54 = vcmask 261120
  %v56 = vsel %vm54, %v40, 0
  %v59 = vsel %vm54, %v41, 0
  %61 = vmatprep.subr.mxu0 0.0
  %62 = vmatpush1.msra.mxu0 0.0
  %63 = vmatprep.subr.mxu0 0.0
  %64 = vmatpush1.msra.mxu0 0.0
  %65 = vmatprep.subr.mxu0 0.0
  %66 = vmatpush1.msra.mxu0 0.0
  %67 = vmatprep.subr.mxu0 0.0
  %68 = vmatpush1.msra.mxu0 0.0
  %69 = vmatprep.subr.mxu0 0.0
  %70 = vmatpush1.msra.mxu0 0.0
  %71 = vmatprep.subr.mxu0 0.0
  %72 = vmatpush1.msra.mxu0 0.0
  %73 = vmatprep.subr.mxu0 0.0
  %74 = vmatpush1.msra.mxu0 0.0
  %75 = vmatprep.subr.mxu0 0.0
  %76 = vmatpush1.msra.mxu0 0.0
  %77 = vmatprep.subr.mxu0 0.0
  %78 = vmatpush1.msra.mxu0 0.0
  %79 = vmatprep.subr.mxu0 0.0
  %80 = vmatpush1.msra.mxu0 0.0
  %81 = vmatprep.subr.mxu0 0.0
  %82 = vmatpush1.msra.mxu0 0.0
  %83 = vmatprep.subr.mxu0 0.0
  %84 = vmatpush1.msra.mxu0 0.0
  %85 = vmatprep.subr.mxu0 %v39
  %86 = vmatpush1.msra.mxu0 %v38
  %87 = vmatprep.subr.mxu0 %v37
  %88 = vmatpush1.msra.mxu0 %v36
  %89 = vmatprep.subr.mxu0 %v35
  %90 = vmatpush1.msra.mxu0 %v34
  %91 = vmatprep.subr.mxu0 %v33
  %92 = vmatpush1.msra.mxu0 %v32
  %93 = vmatprep.subr.mxu0 0.0
  %94 = vmatpush2.msra.mxu0 0.0
  %95 = vmatprep.subr.mxu0 0.0
  %96 = vmatpush2.msra.mxu0 0.0
  %97 = vmatprep.subr.mxu0 0.0
  %98 = vmatpush2.msra.mxu0 0.0
  %99 = vmatprep.subr.mxu0 0.0
  %100 = vmatpush2.msra.mxu0 0.0
  %101 = vmatprep.subr.mxu0 0.0
  %102 = vmatpush2.msra.mxu0 0.0
  %103 = vmatprep.subr.mxu0 0.0
  %104 = vmatpush2.msra.mxu0 0.0
  %105 = vmatprep.subr.mxu0 0.0
  %106 = vmatpush2.msra.mxu0 0.0
  %107 = vmatprep.subr.mxu0 0.0
  %108 = vmatpush2.msra.mxu0 0.0
  %109 = vmatprep.subr.mxu0 0.0
  %110 = vmatpush2.msra.mxu0 0.0
  %111 = vmatprep.subr.mxu0 0.0
  %112 = vmatpush2.msra.mxu0 0.0
  %113 = vmatprep.subr.mxu0 0.0
  %114 = vmatpush2.msra.mxu0 0.0
  %115 = vmatprep.subr.mxu0 0.0
  %116 = vmatpush2.msra.mxu0 0.0
  %117 = vmatprep.subr.mxu0 0.0
  %118 = vmatpush2.msra.mxu0 0.0
  %119 = vmatprep.subr.mxu0 0.0
  %120 = vmatpush2.msra.mxu0 0.0
  %121 = vmatprep.subr.mxu0 0.0
  %122 = vmatpush2.msra.mxu0 0.0
  %123 = vmatprep.subr.mxu0 0.0
  %124 = vmatpush2.msra.mxu0 0.0
  %125 = vmatprep.mubr.f32.mxu0 0.0
  %126 = vmatmul.mubr.f32.gmra.mxu0 %v56
  %v127 = vpop.f32.mrf.mxu0
  %v128 = vadd.f32 %v47, %v127
  %v129 = vpop.f32.mrf.mxu0
  %v130 = vadd.f32 %v47, %v129
  %131 = vmatprep.mubr.f32.mxu0 0.0
  %132 = vmatmul.mubr.f32.gmra.mxu0 %v59
  %v133 = vpop.f32.mrf.mxu0
  %v134 = vadd.f32 %v52, %v133
  %v135 = vpop.f32.mrf.mxu0
  %v136 = vadd.f32 %v52, %v135
  %137 = vdwg.mxu0
  %vm138 = vcmp.gt.f32.partialorder %v128, 0.0
  %vm139 = vcmp.gt.f32.partialorder %v130, 0.0
  %vm140 = vcmp.gt.f32.partialorder %v134, 0.0
  %vm141 = vcmp.gt.f32.partialorder %v136, 0.0
  %v142 = vmul.f32 %v128, 0.01
  %v143 = vmul.f32 %v130, 0.01
  %v144 = vmul.f32 %v134, 0.01
  %v145 = vmul.f32 %v136, 0.01
  %v146 = vsel %vm138, %v128, %v142
  %v147 = vsel %vm139, %v130, %v143
  %v148 = vsel %vm140, %v134, %v144
  %v149 = vsel %vm141, %v136, %v145
  %v150 = vld [vmem:[%s3] sm:$0xff]
  %v151 = vld [vmem:[%s4] sm:$0xff]
  %153 = vset.pattern.permute.xlu0 0
  %154 = vperm.xlu0 %153, %v151
  %v155 = vpop.permute.xlu0 %154
  %vm157 = vcmask 130048
  %v159 = vsel %vm157, %v150, 0
  %161 = vmatprep.subr.mxu0 0.0
  %162 = vmatpush1.msra.mxu0 0.0
  %163 = vmatprep.subr.mxu0 0.0
  %164 = vmatpush1.msra.mxu0 0.0
  %165 = vmatprep.subr.mxu0 0.0
  %166 = vmatpush1.msra.mxu0 0.0
  %167 = vmatprep.subr.mxu0 0.0
  %168 = vmatpush1.msra.mxu0 0.0
  %169 = vmatprep.subr.mxu0 0.0
  %170 = vmatpush1.msra.mxu0 0.0
  %171 = vmatprep.subr.mxu0 0.0
  %172 = vmatpush1.msra.mxu0 0.0
  %173 = vmatprep.subr.mxu0 0.0
  %174 = vmatpush1.msra.mxu0 0.0
  %175 = vmatprep.subr.mxu0 0.0
  %176 = vmatpush1.msra.mxu0 0.0
  %177 = vmatprep.subr.mxu0 0.0
  %178 = vmatpush1.msra.mxu0 0.0
  %179 = vmatprep.subr.mxu0 0.0
  %180 = vmatpush1.msra.mxu0 0.0
  %181 = vmatprep.subr.mxu0 0.0
  %182 = vmatpush1.msra.mxu0 0.0
  %183 = vmatprep.subr.mxu0 0.0
  %184 = vmatpush1.msra.mxu0 0.0
  %185 = vmatprep.subr.mxu0 0.0
  %186 = vmatpush1.msra.mxu0 0.0
  %187 = vmatprep.subr.mxu0 0.0
  %188 = vmatpush1.msra.mxu0 0.0
  %189 = vmatprep.subr.mxu0 %v149
  %190 = vmatpush1.msra.mxu0 %v148
  %191 = vmatprep.subr.mxu0 %v147
  %192 = vmatpush1.msra.mxu0 %v146
  %193 = vmatprep.subr.mxu0 0.0
  %194 = vmatpush2.msra.mxu0 0.0
  %195 = vmatprep.subr.mxu0 0.0
  %196 = vmatpush2.msra.mxu0 0.0
  %197 = vmatprep.subr.mxu0 0.0
  %198 = vmatpush2.msra.mxu0 0.0
  %199 = vmatprep.subr.mxu0 0.0
  %200 = vmatpush2.msra.mxu0 0.0
  %201 = vmatprep.subr.mxu0 0.0
  %202 = vmatpush2.msra.mxu0 0.0
  %203 = vmatprep.subr.mxu0 0.0
  %204 = vmatpush2.msra.mxu0 0.0
  %205 = vmatprep.subr.mxu0 0.0
  %206 = vmatpush2.msra.mxu0 0.0
  %207 = vmatprep.subr.mxu0 0.0
  %208 = vmatpush2.msra.mxu0 0.0
  %209 = vmatprep.subr.mxu0 0.0
  %210 = vmatpush2.msra.mxu0 0.0
  %211 = vmatprep.subr.mxu0 0.0
  %212 = vmatpush2.msra.mxu0 0.0
  %213 = vmatprep.subr.mxu0 0.0
  %214 = vmatpush2.msra.mxu0 0.0
  %215 = vmatprep.subr.mxu0 0.0
  %216 = vmatpush2.msra.mxu0 0.0
  %217 = vmatprep.subr.mxu0 0.0
  %218 = vmatpush2.msra.mxu0 0.0
  %219 = vmatprep.subr.mxu0 0.0
  %220 = vmatpush2.msra.mxu0 0.0
  %221 = vmatprep.subr.mxu0 0.0
  %222 = vmatpush2.msra.mxu0 0.0
  %223 = vmatprep.subr.mxu0 0.0
  %224 = vmatpush2.msra.mxu0 0.0
  %225 = vmatprep.mubr.f32.mxu0 0.0
  %226 = vmatmul.mubr.f32.gmra.mxu0 %v159
  %v227 = vpop.f32.mrf.mxu0
  %v228 = vadd.f32 %v155, %v227
  %v229 = vpop.f32.mrf.mxu0
  %v230 = vadd.f32 %v155, %v229
  %231 = vdwg.mxu0
  %vm232 = vcmp.gt.f32.partialorder %v228, 0.0
  %vm233 = vcmp.gt.f32.partialorder %v230, 0.0
  %v234 = vmul.f32 %v228, 0.01
  %v235 = vmul.f32 %v230, 0.01
  %v236 = vsel %vm232, %v228, %v234
  %v237 = vsel %vm233, %v230, %v235
  %v238 = vld [vmem:[%s5] sm:$0xff]
  %v239 = vld [vmem:[%s6] sm:$0xff]
  %241 = vset.pattern.permute.xlu0 0
  %242 = vperm.xlu0 %241, %v239
  %v243 = vpop.permute.xlu0 %242
  %vm245 = vcmask 64512
  %v247 = vsel %vm245, %v238, 0
  %249 = vmatprep.subr.mxu0 0.0
  %250 = vmatpush1.msra.mxu0 0.0
  %251 = vmatprep.subr.mxu0 0.0
  %252 = vmatpush1.msra.mxu0 0.0
  %253 = vmatprep.subr.mxu0 0.0
  %254 = vmatpush1.msra.mxu0 0.0
  %255 = vmatprep.subr.mxu0 0.0
  %256 = vmatpush1.msra.mxu0 0.0
  %257 = vmatprep.subr.mxu0 0.0
  %258 = vmatpush1.msra.mxu0 0.0
  %259 = vmatprep.subr.mxu0 0.0
  %260 = vmatpush1.msra.mxu0 0.0
  %261 = vmatprep.subr.mxu0 0.0
  %262 = vmatpush1.msra.mxu0 0.0
  %263 = vmatprep.subr.mxu0 0.0
  %264 = vmatpush1.msra.mxu0 0.0
  %265 = vmatprep.subr.mxu0 0.0
  %266 = vmatpush1.msra.mxu0 0.0
  %267 = vmatprep.subr.mxu0 0.0
  %268 = vmatpush1.msra.mxu0 0.0
  %269 = vmatprep.subr.mxu0 0.0
  %270 = vmatpush1.msra.mxu0 0.0
  %271 = vmatprep.subr.mxu0 0.0
  %272 = vmatpush1.msra.mxu0 0.0
  %273 = vmatprep.subr.mxu0 0.0
  %274 = vmatpush1.msra.mxu0 0.0
  %275 = vmatprep.subr.mxu0 0.0
  %276 = vmatpush1.msra.mxu0 0.0
  %277 = vmatprep.subr.mxu0 0.0
  %278 = vmatpush1.msra.mxu0 0.0
  %279 = vmatprep.subr.mxu0 %v237
  %280 = vmatpush1.msra.mxu0 %v236
  %281 = vmatprep.subr.mxu0 0.0
  %282 = vmatpush2.msra.mxu0 0.0
  %283 = vmatprep.subr.mxu0 0.0
  %284 = vmatpush2.msra.mxu0 0.0
  %285 = vmatprep.subr.mxu0 0.0
  %286 = vmatpush2.msra.mxu0 0.0
  %287 = vmatprep.subr.mxu0 0.0
  %288 = vmatpush2.msra.mxu0 0.0
  %289 = vmatprep.subr.mxu0 0.0
  %290 = vmatpush2.msra.mxu0 0.0
  %291 = vmatprep.subr.mxu0 0.0
  %292 = vmatpush2.msra.mxu0 0.0
  %293 = vmatprep.subr.mxu0 0.0
  %294 = vmatpush2.msra.mxu0 0.0
  %295 = vmatprep.subr.mxu0 0.0
  %296 = vmatpush2.msra.mxu0 0.0
  %297 = vmatprep.subr.mxu0 0.0
  %298 = vmatpush2.msra.mxu0 0.0
  %299 = vmatprep.subr.mxu0 0.0
  %300 = vmatpush2.msra.mxu0 0.0
  %301 = vmatprep.subr.mxu0 0.0
  %302 = vmatpush2.msra.mxu0 0.0
  %303 = vmatprep.subr.mxu0 0.0
  %304 = vmatpush2.msra.mxu0 0.0
  %305 = vmatprep.subr.mxu0 0.0
  %306 = vmatpush2.msra.mxu0 0.0
  %307 = vmatprep.subr.mxu0 0.0
  %308 = vmatpush2.msra.mxu0 0.0
  %309 = vmatprep.subr.mxu0 0.0
  %310 = vmatpush2.msra.mxu0 0.0
  %311 = vmatprep.subr.mxu0 0.0
  %312 = vmatpush2.msra.mxu0 0.0
  %313 = vmatprep.mubr.f32.mxu0 0.0
  %314 = vmatmul.mubr.f32.gmra.mxu0 %v247
  %v315 = vpop.f32.mrf.mxu0
  %v316 = vadd.f32 %v243, %v315
  %v317 = vpop.f32.mrf.mxu0
  %v318 = vadd.f32 %v243, %v317
  %319 = vdwg.mxu0
  %vm320 = vcmp.gt.f32.partialorder %v316, 0.0
  %vm321 = vcmp.gt.f32.partialorder %v318, 0.0
  %v322 = vmul.f32 %v316, 0.01
  %v323 = vmul.f32 %v318, 0.01
  %v324 = vsel %vm320, %v316, %v322
  %v325 = vsel %vm321, %v318, %v323
  %v326 = vld [vmem:[%s7] sm:$0xff]
  %v327 = vld [vmem:[%s8] sm:$0xff]
  %329 = vset.pattern.permute.xlu0 0
  %330 = vperm.xlu0 %329, %v327
  %v331 = vpop.permute.xlu0 %330
  %v334 = vsel %vm245, %v326, 0
  %336 = vmatprep.subr.mxu0 0.0
  %337 = vmatpush1.msra.mxu0 0.0
  %338 = vmatprep.subr.mxu0 0.0
  %339 = vmatpush1.msra.mxu0 0.0
  %340 = vmatprep.subr.mxu0 0.0
  %341 = vmatpush1.msra.mxu0 0.0
  %342 = vmatprep.subr.mxu0 0.0
  %343 = vmatpush1.msra.mxu0 0.0
  %344 = vmatprep.subr.mxu0 0.0
  %345 = vmatpush1.msra.mxu0 0.0
  %346 = vmatprep.subr.mxu0 0.0
  %347 = vmatpush1.msra.mxu0 0.0
  %348 = vmatprep.subr.mxu0 0.0
  %349 = vmatpush1.msra.mxu0 0.0
  %350 = vmatprep.subr.mxu0 0.0
  %351 = vmatpush1.msra.mxu0 0.0
  %352 = vmatprep.subr.mxu0 0.0
  %353 = vmatpush1.msra.mxu0 0.0
  %354 = vmatprep.subr.mxu0 0.0
  %355 = vmatpush1.msra.mxu0 0.0
  %356 = vmatprep.subr.mxu0 0.0
  %357 = vmatpush1.msra.mxu0 0.0
  %358 = vmatprep.subr.mxu0 0.0
  %359 = vmatpush1.msra.mxu0 0.0
  %360 = vmatprep.subr.mxu0 0.0
  %361 = vmatpush1.msra.mxu0 0.0
  %362 = vmatprep.subr.mxu0 0.0
  %363 = vmatpush1.msra.mxu0 0.0
  %364 = vmatprep.subr.mxu0 0.0
  %365 = vmatpush1.msra.mxu0 0.0
  %366 = vmatprep.subr.mxu0 %v325
  %367 = vmatpush1.msra.mxu0 %v324
  %368 = vmatprep.subr.mxu0 0.0
  %369 = vmatpush2.msra.mxu0 0.0
  %370 = vmatprep.subr.mxu0 0.0
  %371 = vmatpush2.msra.mxu0 0.0
  %372 = vmatprep.subr.mxu0 0.0
  %373 = vmatpush2.msra.mxu0 0.0
  %374 = vmatprep.subr.mxu0 0.0
  %375 = vmatpush2.msra.mxu0 0.0
  %376 = vmatprep.subr.mxu0 0.0
  %377 = vmatpush2.msra.mxu0 0.0
  %378 = vmatprep.subr.mxu0 0.0
  %379 = vmatpush2.msra.mxu0 0.0
  %380 = vmatprep.subr.mxu0 0.0
  %381 = vmatpush2.msra.mxu0 0.0
  %382 = vmatprep.subr.mxu0 0.0
  %383 = vmatpush2.msra.mxu0 0.0
  %384 = vmatprep.subr.mxu0 0.0
  %385 = vmatpush2.msra.mxu0 0.0
  %386 = vmatprep.subr.mxu0 0.0
  %387 = vmatpush2.msra.mxu0 0.0
  %388 = vmatprep.subr.mxu0 0.0
  %389 = vmatpush2.msra.mxu0 0.0
  %390 = vmatprep.subr.mxu0 0.0
  %391 = vmatpush2.msra.mxu0 0.0
  %392 = vmatprep.subr.mxu0 0.0
  %393 = vmatpush2.msra.mxu0 0.0
  %394 = vmatprep.subr.mxu0 0.0
  %395 = vmatpush2.msra.mxu0 0.0
  %396 = vmatprep.subr.mxu0 0.0
  %397 = vmatpush2.msra.mxu0 0.0
  %398 = vmatprep.subr.mxu0 0.0
  %399 = vmatpush2.msra.mxu0 0.0
  %400 = vmatprep.mubr.f32.mxu0 0.0
  %401 = vmatmul.mubr.f32.gmra.mxu0 %v334
  %v402 = vpop.f32.mrf.mxu0
  %v403 = vadd.f32 %v331, %v402
  %v404 = vpop.f32.mrf.mxu0
  %v405 = vadd.f32 %v331, %v404
  %406 = vdwg.mxu0
  %vm407 = vcmp.gt.f32.partialorder %v403, 0.0
  %vm408 = vcmp.gt.f32.partialorder %v405, 0.0
  %v409 = vmul.f32 %v403, 0.01
  %v410 = vmul.f32 %v405, 0.01
  %v411 = vsel %vm407, %v403, %v409
  %v412 = vsel %vm408, %v405, %v410
  %413 = vst [vmem:[%s9] sm:$0xff] %v411
  %414 = vst [vmem:[%s9 + $0x8] sm:$0xff] %v412
  // Predicated region
  $region38: #{mlp_forward.1} parent=0 // pred_check
    _
  $region39: #{mlp_forward.1} parent=0 // pred_check_branch
    %416 = sbr.rel (0) target = $region41
  $region40: #{mlp_forward.1} parent=0 // pred_region
    _
  $region41: #{mlp_forward.1} parent=0 // pred_fallthru
    _
  // Predicated region
  $region42: #{mlp_forward.1} parent=0 // pred_check
    _
  $region43: #{mlp_forward.1} parent=0 // pred_check_branch
    %418 = sbr.rel (0) target = $region45
  $region44: #{mlp_forward.1} parent=0 // pred_region
    _
  $region45: #{mlp_forward.1} parent=0 // pred_fallthru
    _

</llo_original>
